<compile_context>
chip_gen: v7x
topology: tpu7x:2x2x1
jax: 0.10.0
libtpu: 0.0.40
codegen_flags: <defaults>
</compile_context>

<pallas_src>
import functools

import jax
import jax.numpy as jnp
from jax.experimental import pallas as pl
from jax.experimental.pallas import tpu as pltpu


_LANES = 128
# Bytes of (pred block + target block) per pipeline buffer.  8 MiB -> 8192 f32
# rows or 16384 bf16 rows per input block; 2 pipeline buffers => ~16 MiB of
# input VMEM, comfortable on v5e/v6e (128 MiB) and v7x (64 MiB physical / TC).
_TILE_PAIR_BYTES = 8 << 20


def _round_up(x, m):
    return (x + m - 1) // m * m


def _tile_pair_budget_bytes():
    """Per-buffer input byte budget, shrunk if the chip has little VMEM."""
    cap = 64 << 20  # v7x-safe fallback
    try:
        cap = int(getattr(pltpu.get_tpu_info(), "vmem_capacity_bytes", cap))
    except Exception:
        pass
    return min(_TILE_PAIR_BYTES, max(cap // 8, 1 << 20))


def _tversky_sums_kernel(p_ref, t_ref, out_ref, *, rows, tile_rows, steps,
                         needs_guard):
    """Accumulate (8, 128) per-vreg partials of sum(p*t), sum(p), sum(t).

    out_ref block: (1, 3, 8, 128) f32, VMEM-resident across the reduction axis
    (grid axis 1).  The final reduce of a few hundred floats is done once in
    the wrapper.
    """
    c = pl.program_id(0)   # megacore split
    i = pl.program_id(1)   # reduction step within the split

    @pl.when(i == 0)
    def _():
        out_ref[...] = jnp.zeros_like(out_ref)

    groups = tile_rows // 8

    def accumulate(mask_rows):
        p = p_ref[...].astype(jnp.float32)
        t = t_ref[...].astype(jnp.float32)
        if mask_rows:  # static flag: only traced for the ragged last block
            valid = rows - (c * steps + i) * tile_rows
            row_ids = jax.lax.broadcasted_iota(jnp.int32, p.shape, 0)
            keep = row_ids < valid
            p = jnp.where(keep, p, 0.0)
            t = jnp.where(keep, t, 0.0)
        # Free reshape (splits the sublane dim); axis-0 sums are pure VALU adds.
        pt = jnp.sum((p * t).reshape(groups, 8, _LANES), axis=0)
        ps = jnp.sum(p.reshape(groups, 8, _LANES), axis=0)
        ts = jnp.sum(t.reshape(groups, 8, _LANES), axis=0)
        # Full (8,128) tiles -> unmasked stores.
        out_ref[0, 0, :, :] += pt
        out_ref[0, 1, :, :] += ps
        out_ref[0, 2, :, :] += ts

    if not needs_guard:
        accumulate(mask_rows=False)
    else:
        valid_rows = rows - (c * steps + i) * tile_rows

        @pl.when(valid_rows >= tile_rows)
        def _():
            accumulate(mask_rows=False)      # interior block: no mask cost

        @pl.when(jnp.logical_and(valid_rows > 0, valid_rows < tile_rows))
        def _():
            accumulate(mask_rows=True)       # ragged last block only
        # valid_rows <= 0 (overflow step of an unbalanced split): no-op; the
        # clamped index map keeps its DMA in-bounds and it contributes nothing.


def _tversky_sums_main(pred_flat, target_flat):
    """Kernel driver for flat arrays whose length is a multiple of 128."""
    n = pred_flat.shape[0]
    rows = n // _LANES
    p_item = jnp.dtype(pred_flat.dtype).itemsize
    t_item = jnp.dtype(target_flat.dtype).itemsize

    # Sublane alignment for the block (packed dtypes pack along sublanes).
    row_align = max(8 * max(1, 4 // p_item), 8 * max(1, 4 // t_item))

    # Biggest lane-dense block that fits the per-buffer VMEM budget, with a
    # 2-way split (v7x megacore) and balanced step counts.
    pair_row_bytes = _LANES * (p_item + t_item)
    max_tile_rows = max(row_align,
                        (_tile_pair_budget_bytes() // pair_row_bytes)
                        // row_align * row_align)
    n_splits = 2 if rows >= 2 * row_align else 1
    steps = max(1, pl.cdiv(rows, n_splits * max_tile_rows))
    tile_rows = _round_up(pl.cdiv(rows, n_splits * steps), row_align)
    total_blocks = pl.cdiv(rows, tile_rows)
    needs_guard = (n_splits * steps * tile_rows) != rows

    pred2d = pred_flat.reshape(rows, _LANES)      # free reshape, native dtype
    target2d = target_flat.reshape(rows, _LANES)

    def in_index_map(c, i):
        # Clamp so overflow steps never issue an OOB DMA (their contribution is
        # skipped inside the kernel).
        return (jnp.minimum(c * steps + i, total_blocks - 1), 0)

    kernel = functools.partial(
        _tversky_sums_kernel, rows=rows, tile_rows=tile_rows, steps=steps,
        needs_guard=needs_guard)

    out_bytes = n_splits * 3 * 8 * _LANES * 4
    cost = pl.CostEstimate(
        flops=4 * n, transcendentals=0,
        bytes_accessed=n * (p_item + t_item) + out_bytes)

    # Double-buffered inputs + headroom; raise explicitly (v5e default is 16 MiB).
    vmem_limit = int(min(64 << 20,
                         max(24 << 20,
                             2 * tile_rows * pair_row_bytes + (8 << 20))))

    partials = pl.pallas_call(
        kernel,
        out_shape=jax.ShapeDtypeStruct((n_splits, 3, 8, _LANES), jnp.float32),
        grid_spec=pltpu.PrefetchScalarGridSpec(
            num_scalar_prefetch=0,
            grid=(n_splits, steps),
            in_specs=[
                pl.BlockSpec((tile_rows, _LANES), in_index_map),
                pl.BlockSpec((tile_rows, _LANES), in_index_map),
            ],
            out_specs=pl.BlockSpec((1, 3, 8, _LANES),
                                   lambda c, i: (c, 0, 0, 0)),
        ),
        compiler_params=pltpu.CompilerParams(
            # TODO(synk): confirm on a v7x xprof trace that the size-2 split
            # axis shards across both TensorCores; if one TC idles, switch it
            # to pltpu.CORE_PARALLEL. No-op on single-core v5e/v6e.
            dimension_semantics=("parallel", "arbitrary"),
            vmem_limit_bytes=vmem_limit,
        ),
        cost_estimate=cost,
    )(pred2d, target2d)

    sums = jnp.sum(partials, axis=(0, 2, 3))  # (3,): [sum(p*t), sum(p), sum(t)]
    return sums[0], sums[1], sums[2]


def _tversky_sums(pred, target):
    """Returns (sum(p*t), sum(p), sum(t)) over all elements."""
    pred_flat = jnp.ravel(pred)
    target_flat = jnp.ravel(target)
    n = pred_flat.shape[0]
    n_main = (n // _LANES) * _LANES

    tp = jnp.float32(0.0)
    sum_p = jnp.float32(0.0)
    sum_t = jnp.float32(0.0)

    if n_main:
        if n_main == n:
            p_main, t_main = pred_flat, target_flat       # no-copy common case
        else:
            # Rare ragged-lane case: slice the 128-aligned prefix instead of
            # padding both full arrays; the <128-element tail is summed below.
            p_main = pred_flat[:n_main]
            t_main = target_flat[:n_main]
        tp, sum_p, sum_t = _tversky_sums_main(p_main, t_main)

    if n_main != n:
        p_tail = pred_flat[n_main:].astype(jnp.float32)
        t_tail = target_flat[n_main:].astype(jnp.float32)
        tp = tp + jnp.sum(p_tail * t_tail)
        sum_p = sum_p + jnp.sum(p_tail)
        sum_t = sum_t + jnp.sum(t_tail)

    return tp, sum_p, sum_t


def focal_tversky_loss(pred, target, alpha=0.7, beta=0.3, gamma=0.75,
                       smooth=1e-05):
    tp, sum_p, sum_t = _tversky_sums(pred, target)
    # fn/fp are derived by subtraction of large f32 sums; clamp at 0 so f32
    # rounding can never push tversky > 1 and make pow(negative, gamma) = NaN.
    fn = jnp.maximum(sum_t - tp, 0.0)   # sum(t * (1 - p))
    fp = jnp.maximum(sum_p - tp, 0.0)   # sum((1 - t) * p)
    tversky = (tp + smooth) / (tp + alpha * fn + beta * fp + smooth)
    tversky_loss = jnp.maximum(1.0 - tversky, 0.0)
    return jnp.power(tversky_loss, gamma)


def _reference_loss(pred, target, alpha=0.7, beta=0.3, gamma=0.75,
                    smooth=1e-05):
    pf = jnp.ravel(pred).astype(jnp.float32)
    tf = jnp.ravel(target).astype(jnp.float32)
    tp = jnp.sum(pf * tf)
    fn = jnp.sum(tf * (1.0 - pf))
    fp = jnp.sum((1.0 - tf) * pf)
    tversky = (tp + smooth) / (tp + alpha * fn + beta * fp + smooth)
    return jnp.power(1.0 - tversky, gamma)


if __name__ == "__main__":
    key = jax.random.PRNGKey(0)

    def make_case(case_key, shape, dtype):
        kp, kt = jax.random.split(case_key)
        pred = jax.random.uniform(kp, shape, dtype=jnp.float32).astype(dtype)
        target = (jax.random.uniform(kt, shape) > 0.5).astype(dtype)
        return pred, target

    cases = [
        ((2, 4, 16, 16), jnp.float32),    # small NCHW: clean 2-way split
        ((2, 4, 16, 16), jnp.bfloat16),   # bf16 streamed natively, cast in-kernel
        ((2, 4, 128, 128), jnp.float32),  # 2-way split, no masking
        ((2, 6, 224, 224), jnp.float32),  # balanced 2-way split, multi-row blocks
        ((2, 3, 15, 17), jnp.float32),    # element count not a multiple of 128
    ]

    keys = jax.random.split(key, len(cases))
    for case_key, (shape, dtype) in zip(keys, cases):
        pred, target = make_case(case_key, shape, dtype)
        loss = jax.block_until_ready(focal_tversky_loss(pred, target))
        ref = jax.block_until_ready(_reference_loss(pred, target))
        assert jnp.allclose(loss, ref, rtol=1e-4, atol=1e-5), \
            (shape, dtype, loss, ref)

    print("KERNEL_OK")
</pallas_src>

<mosaic_0001>
module attributes {stable_mosaic.version = 11 : i64} {
  func.func @_tversky_sums_kernel(%arg0: i32, %arg1: i32, %arg2: memref<8x128xf32, #tpu.memory_space<vmem>>, %arg3: memref<8x128xf32, #tpu.memory_space<vmem>>, %arg4: memref<1x3x8x128xf32, #tpu.memory_space<vmem>>) attributes {dimension_semantics = [#tpu.dimension_semantics<parallel>, #tpu.dimension_semantics<arbitrary>], iteration_bounds = array<i64: 2, 1>, scalar_prefetch = 0 : i64, scratch_operands = 0 : i64, tpu.core_type = #tpu.core_type<tc>, window_params = [{transform_indices = @transform_0, window_bounds = array<i64: 8, 128>}, {transform_indices = @transform_1, window_bounds = array<i64: 8, 128>}, {transform_indices = @transform_2, window_bounds = array<i64: 1, 3, 8, 128>}]} {
    %c0_i32 = arith.constant 0 : i32
    %0 = arith.cmpi eq, %arg1, %c0_i32 : i32
    %1 = arith.extui %0 : i1 to i32
    %c0_i32_0 = arith.constant 0 : i32
    %2 = arith.cmpi ne, %1, %c0_i32_0 : i32
    scf.if %2 {
      %cst_28 = arith.constant 0.000000e+00 : f32
      %30 = vector.broadcast %cst_28 : f32 to vector<1x3x8x128xf32>
      %c0_29 = arith.constant 0 : index
      %c0_30 = arith.constant 0 : index
      %c0_31 = arith.constant 0 : index
      %c0_32 = arith.constant 0 : index
      %31 = vector.load %arg4[%c0_29, %c0_30, %c0_31, %c0_32] : memref<1x3x8x128xf32, #tpu.memory_space<vmem>>, vector<1x3x8x128xf32>
      tpu.vector_store %arg4[%c0_29, %c0_30, %c0_31, %c0_32], %30 {strides = array<i32>} : memref<1x3x8x128xf32, #tpu.memory_space<vmem>>, vector<1x3x8x128xf32>,
    } else {
    }
    %c0 = arith.constant 0 : index
    %c0_1 = arith.constant 0 : index
    %3 = vector.load %arg2[%c0, %c0_1] : memref<8x128xf32, #tpu.memory_space<vmem>>, vector<8x128xf32>
    %c0_2 = arith.constant 0 : index
    %c0_3 = arith.constant 0 : index
    %4 = vector.load %arg3[%c0_2, %c0_3] : memref<8x128xf32, #tpu.memory_space<vmem>>, vector<8x128xf32>
    %5 = arith.mulf %3, %4 : vector<8x128xf32>
    %6 = vector.shape_cast %5 : vector<8x128xf32> to vector<1x8x128xf32>
    %cst = arith.constant dense<0.000000e+00> : vector<8x128xf32>
    %7 = vector.multi_reduction <add>, %6, %cst [0] : vector<1x8x128xf32> to vector<8x128xf32>
    %8 = vector.shape_cast %3 : vector<8x128xf32> to vector<1x8x128xf32>
    %cst_4 = arith.constant dense<0.000000e+00> : vector<8x128xf32>
    %9 = vector.multi_reduction <add>, %8, %cst_4 [0] : vector<1x8x128xf32> to vector<8x128xf32>
    %10 = vector.shape_cast %4 : vector<8x128xf32> to vector<1x8x128xf32>
    %cst_5 = arith.constant dense<0.000000e+00> : vector<8x128xf32>
    %11 = vector.multi_reduction <add>, %10, %cst_5 [0] : vector<1x8x128xf32> to vector<8x128xf32>
    %c0_6 = arith.constant 0 : index
    %c0_7 = arith.constant 0 : index
    %c0_8 = arith.constant 0 : index
    %c0_9 = arith.constant 0 : index
    %12 = vector.load %arg4[%c0_6, %c0_7, %c0_8, %c0_9] : memref<1x3x8x128xf32, #tpu.memory_space<vmem>>, vector<1x1x8x128xf32>
    %13 = vector.shape_cast %12 : vector<1x1x8x128xf32> to vector<8x128xf32>
    %14 = arith.addf %13, %7 : vector<8x128xf32>
    %c0_10 = arith.constant 0 : index
    %c0_11 = arith.constant 0 : index
    %c0_12 = arith.constant 0 : index
    %c0_13 = arith.constant 0 : index
    %15 = vector.load %arg4[%c0_10, %c0_11, %c0_12, %c0_13] : memref<1x3x8x128xf32, #tpu.memory_space<vmem>>, vector<1x1x8x128xf32>
    %16 = vector.shape_cast %15 : vector<1x1x8x128xf32> to vector<8x128xf32>
    %17 = vector.shape_cast %14 : vector<8x128xf32> to vector<1x1x8x128xf32>
    tpu.vector_store %arg4[%c0_10, %c0_11, %c0_12, %c0_13], %17 {strides = array<i32>} : memref<1x3x8x128xf32, #tpu.memory_space<vmem>>, vector<1x1x8x128xf32>,
    %c0_14 = arith.constant 0 : index
    %c1 = arith.constant 1 : index
    %c0_15 = arith.constant 0 : index
    %c0_16 = arith.constant 0 : index
    %18 = vector.load %arg4[%c0_14, %c1, %c0_15, %c0_16] : memref<1x3x8x128xf32, #tpu.memory_space<vmem>>, vector<1x1x8x128xf32>
    %19 = vector.shape_cast %18 : vector<1x1x8x128xf32> to vector<8x128xf32>
    %20 = arith.addf %19, %9 : vector<8x128xf32>
    %c0_17 = arith.constant 0 : index
    %c1_18 = arith.constant 1 : index
    %c0_19 = arith.constant 0 : index
    %c0_20 = arith.constant 0 : index
    %21 = vector.load %arg4[%c0_17, %c1_18, %c0_19, %c0_20] : memref<1x3x8x128xf32, #tpu.memory_space<vmem>>, vector<1x1x8x128xf32>
    %22 = vector.shape_cast %21 : vector<1x1x8x128xf32> to vector<8x128xf32>
    %23 = vector.shape_cast %20 : vector<8x128xf32> to vector<1x1x8x128xf32>
    tpu.vector_store %arg4[%c0_17, %c1_18, %c0_19, %c0_20], %23 {strides = array<i32>} : memref<1x3x8x128xf32, #tpu.memory_space<vmem>>, vector<1x1x8x128xf32>,
    %c0_21 = arith.constant 0 : index
    %c2 = arith.constant 2 : index
    %c0_22 = arith.constant 0 : index
    %c0_23 = arith.constant 0 : index
    %24 = vector.load %arg4[%c0_21, %c2, %c0_22, %c0_23] : memref<1x3x8x128xf32, #tpu.memory_space<vmem>>, vector<1x1x8x128xf32>
    %25 = vector.shape_cast %24 : vector<1x1x8x128xf32> to vector<8x128xf32>
    %26 = arith.addf %25, %11 : vector<8x128xf32>
    %c0_24 = arith.constant 0 : index
    %c2_25 = arith.constant 2 : index
    %c0_26 = arith.constant 0 : index
    %c0_27 = arith.constant 0 : index
    %27 = vector.load %arg4[%c0_24, %c2_25, %c0_26, %c0_27] : memref<1x3x8x128xf32, #tpu.memory_space<vmem>>, vector<1x1x8x128xf32>
    %28 = vector.shape_cast %27 : vector<1x1x8x128xf32> to vector<8x128xf32>
    %29 = vector.shape_cast %26 : vector<8x128xf32> to vector<1x1x8x128xf32>
    tpu.vector_store %arg4[%c0_24, %c2_25, %c0_26, %c0_27], %29 {strides = array<i32>} : memref<1x3x8x128xf32, #tpu.memory_space<vmem>>, vector<1x1x8x128xf32>,
    return
  }
  func.func @transform_0(%arg0: i32, %arg1: i32) -> (i32, i32) {
    %c1_i32 = arith.constant 1 : i32
    %0 = arith.muli %arg0, %c1_i32 : i32
    %1 = arith.addi %0, %arg1 : i32
    %c1_i32_0 = arith.constant 1 : i32
    %2 = arith.minsi %1, %c1_i32_0 : i32
    %c0_i32 = arith.constant 0 : i32
    %c0_i32_1 = arith.constant 0 : i32
    return %2, %c0_i32 : i32, i32
  }
  func.func @transform_1(%arg0: i32, %arg1: i32) -> (i32, i32) {
    %c1_i32 = arith.constant 1 : i32
    %0 = arith.muli %arg0, %c1_i32 : i32
    %1 = arith.addi %0, %arg1 : i32
    %c1_i32_0 = arith.constant 1 : i32
    %2 = arith.minsi %1, %c1_i32_0 : i32
    %c0_i32 = arith.constant 0 : i32
    %c0_i32_1 = arith.constant 0 : i32
    return %2, %c0_i32 : i32, i32
  }
  func.func @transform_2(%arg0: i32, %arg1: i32) -> (i32, i32, i32, i32) {
    %c0_i32 = arith.constant 0 : i32
    %c0_i32_0 = arith.constant 0 : i32
    %c0_i32_1 = arith.constant 0 : i32
    %c0_i32_2 = arith.constant 0 : i32
    return %arg0, %c0_i32, %c0_i32_0, %c0_i32_1 : i32, i32, i32, i32
  }
}

</mosaic_0001>

<llo_original>
// kernel: tpu_custom_call.1
$region0: #{tpu_custom_call.1}
  #allocation0 [shape = 'u32[]', space=smem, size = 0x4, offset = 0x4, fixed_abs, tag = 'smem constant byte address 0x4 - core index']
  #allocation1 [shape = 'u32[144,128]{1,0:T(1,128)}', space=vmem, size = 0x12000, scoped, tag = 'internal scratch']
  %s0 = inlined_call_operand.hbm [shape: f32[16,128], index: 0, kind: input, shape index: {}]
  %s1 = inlined_call_operand.hbm [shape: f32[16,128], index: 1, kind: input, shape index: {}]
  %s2 = inlined_call_operand.hbm [shape: f32[2,3,8,128], index: 2, kind: output, shape index: {}]
  %s3 = sld [smem:[#allocation0]]
  $region53: #{tpu_custom_call.1} parent=0
    _
  %s5 = ssub.s32 1, %s3
  %s6 = scalar_select 0, %s5, %s3
  $region1: #{tpu_custom_call.1} parent=0
    #allocation2 [shape = 'u8[8192]{0}', space=vmem, size = 0x2000, scoped, tag = 'input window, operand 0']
    #allocation3 [shape = 's32[2]{0}', space=sflag, size = 0x8, scoped, tag = 'scoped memory for tpu_custom_call.1']
    #allocation4 [shape = 's32[2]{0}', space=sflag, size = 0x8, scoped, tag = 'scoped memory for tpu_custom_call.1']
    #allocation5 [shape = 'u8[8192]{0}', space=vmem, size = 0x2000, scoped, tag = 'input window, operand 1']
    #allocation6 [shape = 's32[2]{0}', space=sflag, size = 0x8, scoped, tag = 'scoped memory for tpu_custom_call.1']
    #allocation7 [shape = 'u8[24576]{0}', space=vmem, size = 0x6000, scoped, tag = 'output window, operand 0']
    %7 = vsyncpa [#allocation3], 0
    %s8 = scalar_lea.sflag [#allocation3], 1
    %9 = vsyncpa %s8, 0
    %10 = vsyncpa [#allocation6], 0
    %s11 = scalar_lea.sflag [#allocation6], 1
    %12 = vsyncpa %s11, 0
    %13 = vsyncpa [#allocation4], 0
    %s14 = scalar_lea.sflag [#allocation4], 1
    %15 = vsyncpa %s14, 0
    loop: start=0, step=1, limit=4
    $region2: #{tpu_custom_call.1} parent=1 // loop_pre_header
      _
    $region3: #{tpu_custom_call.1} parent=1 // loop_header
      %s17 = sphi 0, %s21
      %p18 = scmp.ge.s32.totalorder %s17, 4
      %s24 = sphi 0, %s36
      %s25 = sphi 0, %s32
      %s26 = sphi 0, %s24
      %s27 = sphi 0, %s25
      %s28 = sphi 0, %s26
      %s29 = sphi 0, %s27
      %s45 = sphi 0, %s47
      %s48 = sphi 0, %s45
      %s49 = sphi 0, %s48
      %s65 = sphi 0, %s49
      %s77 = sphi 0, %s79
      %s80 = sphi 0, %s77
      %s81 = sphi 0, %s80
      %s97 = sphi 0, %s81
      %s103 = sphi 0, %s105
      %s106 = sphi 0, %s103
      %s107 = sphi 0, %s106
      %s123 = sphi 0, %s107
    $region4: #{tpu_custom_call.1} parent=1 // loop_header_branch
      %20 = sbr.rel (%p18) target = $region8
    $region5: #{tpu_custom_call.1} parent=1 // loop_body
      %s22 = ssub.s32 %s17, 1
      %s23 = ssub.s32 %s17, 2
      %s30 = sadd.s32 1, %s25
      %p31 = scmp.ge.s32.totalorder %s30, 1
      %s32 = scalar_select %p31, 0, %s30
      %s33 = sadd.s32 1, %s24
      %s34 = scalar_select %p31, %s33, %s24
      %p35 = scmp.ge.s32.totalorder %s34, 2
      %s36 = scalar_select %p35, 0, %s34
      %s37 = sadd.s32 %s24, %s25
      %p38 = scmp.lt.s32.totalorder %s37, 1
      %s39 = scalar_select %p38, %s37, 1
      %s40 = sadd.s32 %s36, %s32
      %p41 = scmp.lt.s32.totalorder %s40, 1
      %s42 = scalar_select %p41, %s40, 1
      %s43 = ssub.s32 %s39, %s42
      %p44 = scmp.eq.s32.totalorder %s43, 0
      %s46 = sadd.s32 %s45, 1
      %s47 = scalar_select %p44, %s45, %s46
      %p50 = pneg %p44
      %p51 = scmp.eq.s32.totalorder %s17, 1
      %p52 = por %p50, %p51
      %p53 = scmp.ne.s32.totalorder %s45, %s48
      %p54 = scmp.eq.s32.totalorder %s17, 0
      %p55 = por %p53, %p54
      %p56 = scmp.ne.s32.totalorder %s45, %s48
      %p57 = scmp.eq.s32.totalorder %s22, 1
      %p58 = por %p56, %p57
      %p59 = scmp.ne.s32.totalorder %s48, %s49
      %p60 = scmp.eq.s32.totalorder %s22, 0
      %p61 = por %p59, %p60
      %p62 = scmp.ne.s32.totalorder %s48, %s49
      %p63 = scmp.eq.s32.totalorder %s23, 1
      %p64 = por %p62, %p63
      %p66 = scmp.ne.s32.totalorder %s49, %s65
      %p67 = scmp.eq.s32.totalorder %s23, 0
      %p68 = por %p66, %p67
      %s69 = sadd.s32 %s24, %s25
      %p70 = scmp.lt.s32.totalorder %s69, 1
      %s71 = scalar_select %p70, %s69, 1
      %s72 = sadd.s32 %s36, %s32
      %p73 = scmp.lt.s32.totalorder %s72, 1
      %s74 = scalar_select %p73, %s72, 1
      %s75 = ssub.s32 %s71, %s74
      %p76 = scmp.eq.s32.totalorder %s75, 0
      %s78 = sadd.s32 %s77, 1
      %s79 = scalar_select %p76, %s77, %s78
      %p82 = pneg %p76
      %p83 = scmp.eq.s32.totalorder %s17, 1
      %p84 = por %p82, %p83
      %p85 = scmp.ne.s32.totalorder %s77, %s80
      %p86 = scmp.eq.s32.totalorder %s17, 0
      %p87 = por %p85, %p86
      %p88 = scmp.ne.s32.totalorder %s77, %s80
      %p89 = scmp.eq.s32.totalorder %s22, 1
      %p90 = por %p88, %p89
      %p91 = scmp.ne.s32.totalorder %s80, %s81
      %p92 = scmp.eq.s32.totalorder %s22, 0
      %p93 = por %p91, %p92
      %p94 = scmp.ne.s32.totalorder %s80, %s81
      %p95 = scmp.eq.s32.totalorder %s23, 1
      %p96 = por %p94, %p95
      %p98 = scmp.ne.s32.totalorder %s81, %s97
      %p99 = scmp.eq.s32.totalorder %s23, 0
      %p100 = por %p98, %p99
      %s101 = ssub.s32 %s24, %s36
      %p102 = scmp.eq.s32.totalorder %s101, 0
      %s104 = sadd.s32 %s103, 1
      %s105 = scalar_select %p102, %s103, %s104
      %p108 = pneg %p102
      %p109 = scmp.eq.s32.totalorder %s17, 1
      %p110 = por %p108, %p109
      %p111 = scmp.ne.s32.totalorder %s103, %s106
      %p112 = scmp.eq.s32.totalorder %s17, 0
      %p113 = por %p111, %p112
      %p114 = scmp.ne.s32.totalorder %s103, %s106
      %p115 = scmp.eq.s32.totalorder %s22, 1
      %p116 = por %p114, %p115
      %p117 = scmp.ne.s32.totalorder %s106, %s107
      %p118 = scmp.eq.s32.totalorder %s22, 0
      %p119 = por %p117, %p118
      %p120 = scmp.ne.s32.totalorder %s106, %s107
      %p121 = scmp.eq.s32.totalorder %s23, 1
      %p122 = por %p120, %p121
      %p124 = scmp.ne.s32.totalorder %s107, %s123
      %p125 = scmp.eq.s32.totalorder %s23, 0
      %p126 = por %p124, %p125
      %p127 = scmp.le.s32.totalorder 1, %s17
      %p128 = scmp.lt.s32.totalorder %s17, 3
      %p129 = pnand %p127, %p128
      %p130 = pneg %p129
      // Predicated region
      $region9: #{tpu_custom_call.1} parent=5 // pred_check
        _
      $region10: #{tpu_custom_call.1} parent=5 // pred_check_branch
        %132 = sbr.rel (%p129) target = $region12
      $region11: #{tpu_custom_call.1} parent=5 // pred_region
        %s133 = ssub.s32 %s17, 1
      $region12: #{tpu_custom_call.1} parent=5 // pred_fallthru
        _
      %p134 = scmp.lt.s32.totalorder %s17, 2
      // Predicated region
      $region13: #{tpu_custom_call.1} parent=5 // pred_check
        %p135 = pneg %p134
      $region14: #{tpu_custom_call.1} parent=5 // pred_check_branch
        %137 = sbr.rel (%p135) target = $region16
      $region15: #{tpu_custom_call.1} parent=5 // pred_region
        // Predicated region
        $region17: #{tpu_custom_call.1} parent=15 // pred_check
          %p138 = pneg %p55
        $region18: #{tpu_custom_call.1} parent=15 // pred_check_branch
          %140 = sbr.rel (%p138) target = $region20
        $region19: #{tpu_custom_call.1} parent=15 // pred_region
          %s141 = sand.u32 %s45, 1
          %s142 = scalar_lea.sflag [#allocation3], %s141
          %s143 = sand.u32 %s45, 1
          %s144 = smul.addr %s143, 8
          %s145 = scalar_lea.vmem [#allocation2], %s144
          %s146 = sadd.s32 %s24, %s25
          %p147 = scmp.lt.s32.totalorder %s146, 1
          %s148 = scalar_select %p147, %s146, 1
          %s150 = ssub.s32 128, 128
          %151 = vsyncadd %s142, %s150
          %s152 = smul.addr %s148, 128
          %s153 = scalar_lea.hbm %s0, %s152
          %s155 = sshll.u32 %s145, 4
          %s156 = int_to_ptr.vmem [resolvable:$true] %s155
          %158 = dma.hbm_to_vmem [thread:$0]  %s153, 128, %s156, %s142
        $region20: #{tpu_custom_call.1} parent=15 // pred_fallthru
          _
        // Predicated region
        $region21: #{tpu_custom_call.1} parent=15 // pred_check
          %p159 = pneg %p87
        $region22: #{tpu_custom_call.1} parent=15 // pred_check_branch
          %161 = sbr.rel (%p159) target = $region24
        $region23: #{tpu_custom_call.1} parent=15 // pred_region
          %s162 = sand.u32 %s77, 1
          %s163 = scalar_lea.sflag [#allocation6], %s162
          %s164 = sand.u32 %s77, 1
          %s165 = smul.addr %s164, 8
          %s166 = scalar_lea.vmem [#allocation5], %s165
          %s167 = sadd.s32 %s24, %s25
          %p168 = scmp.lt.s32.totalorder %s167, 1
          %s169 = scalar_select %p168, %s167, 1
          %s171 = ssub.s32 128, 128
          %172 = vsyncadd %s163, %s171
          %s173 = smul.addr %s169, 128
          %s174 = scalar_lea.hbm %s1, %s173
          %s176 = sshll.u32 %s166, 4
          %s177 = int_to_ptr.vmem [resolvable:$true] %s176
          %179 = dma.hbm_to_vmem [thread:$0]  %s174, 128, %s177, %s163
        $region24: #{tpu_custom_call.1} parent=15 // pred_fallthru
          _
      $region16: #{tpu_custom_call.1} parent=5 // pred_fallthru
        _
      %p180 = scmp.le.s32.totalorder 1, %s17
      %p181 = scmp.lt.s32.totalorder %s17, 3
      %p182 = pnand %p180, %p181
      %p183 = pneg %p182
      // Predicated region
      $region25: #{tpu_custom_call.1} parent=5 // pred_check
        _
      $region26: #{tpu_custom_call.1} parent=5 // pred_check_branch
        %185 = sbr.rel (%p182) target = $region28
      $region27: #{tpu_custom_call.1} parent=5 // pred_region
        %s186 = ssub.s32 %s17, 1
        %s187 = sand.u32 %s48, 1
        %s188 = scalar_lea.sflag [#allocation3], %s187
        %s189 = sand.u32 %s48, 1
        %s190 = smul.addr %s189, 8
        %s191 = scalar_lea.vmem [#allocation2], %s190
        // Predicated region
        $region29: #{tpu_custom_call.1} parent=27 // pred_check
          %p192 = pneg %p61
        $region30: #{tpu_custom_call.1} parent=27 // pred_check_branch
          %194 = sbr.rel (%p192) target = $region32
        $region31: #{tpu_custom_call.1} parent=27 // pred_region
          %195 = dma.done %s188, 128
        $region32: #{tpu_custom_call.1} parent=27 // pred_fallthru
          _
        %s196 = sand.u32 %s80, 1
        %s197 = scalar_lea.sflag [#allocation6], %s196
        %s198 = sand.u32 %s80, 1
        %s199 = smul.addr %s198, 8
        %s200 = scalar_lea.vmem [#allocation5], %s199
        // Predicated region
        $region33: #{tpu_custom_call.1} parent=27 // pred_check
          %p201 = pneg %p93
        $region34: #{tpu_custom_call.1} parent=27 // pred_check_branch
          %203 = sbr.rel (%p201) target = $region36
        $region35: #{tpu_custom_call.1} parent=27 // pred_region
          %204 = dma.done %s197, 128
        $region36: #{tpu_custom_call.1} parent=27 // pred_fallthru
          _
        %s205 = sand.u32 %s48, 1
        %s206 = scalar_lea.sflag [#allocation3], %s205
        %s207 = sand.u32 %s48, 1
        %s208 = smul.addr %s207, 8
        %s209 = scalar_lea.vmem [#allocation2], %s208
        %p210 = pneg %p61
        %p211 = pneg %p58
        %s212 = sand.u32 %s80, 1
        %s213 = scalar_lea.sflag [#allocation6], %s212
        %s214 = sand.u32 %s80, 1
        %s215 = smul.addr %s214, 8
        %s216 = scalar_lea.vmem [#allocation5], %s215
        %p217 = pneg %p93
        %p218 = pneg %p90
        %p219 = pneg %p119
        %p220 = pneg %p116
        %s221 = sand.u32 %s106, 1
        %s222 = scalar_lea.sflag [#allocation4], %s221
        %s223 = sand.u32 %s106, 1
        %s224 = smul.addr %s223, 24
        %s225 = scalar_lea.vmem [#allocation7], %s224
        %s226 = sadd.s32 %s26, %s27
        %p227 = scmp.lt.s32.totalorder %s226, 1
        %s228 = scalar_select %p227, %s226, 1
        %s229 = sadd.s32 %s26, %s27
        %p230 = scmp.lt.s32.totalorder %s229, 1
        %s231 = scalar_select %p230, %s229, 1
        %p232 = scmp.eq.s32.totalorder %s27, 0
        // Predicated region
        $region37: #{tpu_custom_call.1} parent=27 // pred_check
          %p233 = pneg %p232
        $region38: #{tpu_custom_call.1} parent=27 // pred_check_branch
          %235 = sbr.rel (%p233) target = $region40
        $region39: #{tpu_custom_call.1} parent=27 // pred_region
          %236 = vst [vmem:[%s225] sm:$0xff] 0.0
          %237 = vst [vmem:[%s225 + $0x8] sm:$0xff] 0.0
          %238 = vst [vmem:[%s225 + $0x10] sm:$0xff] 0.0
        $region40: #{tpu_custom_call.1} parent=27 // pred_fallthru
          _
        %v239 = vld [vmem:[%s191] sm:$0xff]
        %v240 = vld [vmem:[%s200] sm:$0xff]
        %v241 = vmul.f32 %v239, %v240
        %v242 = vadd.f32 %v241, 0.0
        %v243 = vadd.f32 %v239, 0.0
        %v244 = vadd.f32 %v240, 0.0
        %v245 = vld [vmem:[%s225] sm:$0xff]
        %v246 = vadd.f32 %v245, %v242
        %247 = vst [vmem:[%s225] sm:$0xff] %v246
        %s248 = scalar_lea.vmem %s225, 8 [#allocation7]
        %v249 = vld [vmem:[%s248] sm:$0xff]
        %v250 = vadd.f32 %v249, %v243
        %251 = vst [vmem:[%s248] sm:$0xff] %v250
        %s252 = scalar_lea.vmem %s225, 16 [#allocation7]
        %v253 = vld [vmem:[%s252] sm:$0xff]
        %v254 = vadd.f32 %v253, %v244
        %255 = vst [vmem:[%s252] sm:$0xff] %v254
        %s256 = sand.u32 %s106, 1
        %s257 = scalar_lea.sflag [#allocation4], %s256
        %s258 = sand.u32 %s106, 1
        %s259 = smul.addr %s258, 24
        %s260 = scalar_lea.vmem [#allocation7], %s259
        // Predicated region
        $region41: #{tpu_custom_call.1} parent=27 // pred_check
          %p261 = pneg %p116
        $region42: #{tpu_custom_call.1} parent=27 // pred_check_branch
          %263 = sbr.rel (%p261) target = $region44
        $region43: #{tpu_custom_call.1} parent=27 // pred_region
          %s265 = ssub.s32 384, 384
          %266 = vsyncadd %s257, %s265
          %s267 = smul.addr %s26, 3
          %s268 = smul.addr %s267, 128
          %s269 = scalar_lea.hbm %s2, %s268
          %s270 = sshll.u32 %s260, 4
          %s271 = int_to_ptr.vmem [resolvable:$true] %s270
          %276 = dma.vmem_to_hbm [thread:$0]  %s271, 384, %s269, %s257, 128, 128, 8
        $region44: #{tpu_custom_call.1} parent=27 // pred_fallthru
          _
      $region28: #{tpu_custom_call.1} parent=5 // pred_fallthru
        _
      %p277 = scmp.le.s32.totalorder 2, %s17
      // Predicated region
      $region45: #{tpu_custom_call.1} parent=5 // pred_check
        %p278 = pneg %p277
      $region46: #{tpu_custom_call.1} parent=5 // pred_check_branch
        %280 = sbr.rel (%p278) target = $region48
      $region47: #{tpu_custom_call.1} parent=5 // pred_region
        %s281 = ssub.s32 %s17, 2
        // Predicated region
        $region49: #{tpu_custom_call.1} parent=47 // pred_check
          %p282 = pneg %p122
        $region50: #{tpu_custom_call.1} parent=47 // pred_check_branch
          %284 = sbr.rel (%p282) target = $region52
        $region51: #{tpu_custom_call.1} parent=47 // pred_region
          %s285 = sand.u32 %s107, 1
          %s286 = scalar_lea.sflag [#allocation4], %s285
          %s287 = sand.u32 %s107, 1
          %s288 = smul.addr %s287, 24
          %s289 = scalar_lea.vmem [#allocation7], %s288
          %290 = dma.done %s286, 384
        $region52: #{tpu_custom_call.1} parent=47 // pred_fallthru
          _
      $region48: #{tpu_custom_call.1} parent=5 // pred_fallthru
        _
    $region6: #{tpu_custom_call.1} parent=1 // loop_footer
      %s21 = sadd.s32 1, %s17
    $region7: #{tpu_custom_call.1} parent=1 // loop_footer_branch
      %16 = sbr.rel target = $region3
    $region8: #{tpu_custom_call.1} parent=1 // loop_exit
      _
    %291 = vsyncpa [#allocation3], 1
    %s292 = scalar_lea.sflag [#allocation3], 1
    %293 = vsyncpa %s292, 1
    %294 = vsyncpa [#allocation6], 1
    %s295 = scalar_lea.sflag [#allocation6], 1
    %296 = vsyncpa %s295, 1
    %297 = vsyncpa [#allocation4], 1
    %s298 = scalar_lea.sflag [#allocation4], 1
    %299 = vsyncpa %s298, 1

</llo_original>
